<compile_context>
chip_gen: v5e
topology: v5e:2x2
jax: 0.10.0
libtpu: 0.0.40
codegen_flags: <defaults>
</compile_context>

<pallas_src>
import jax
import jax.numpy as jnp
from jax.experimental import pallas as pl
from jax.experimental.pallas import tpu as pltpu


def _round_up(x, m):
    return ((x + m - 1) // m) * m


def _make_mlp_kernel(nb, chid, chid_chunk):
    """Build the kernel; nb / chid / chid_chunk are trace-time constants."""
    n_chunks = -(-chid // chid_chunk)

    def kernel(x_ref, w1_ref, b1_ref, w2_ref, b2_ref, o_ref):
        # x_ref:  (nb, Cin,  T)   nb fused images x one spatial slab
        # w1_ref: (Chid, Cin)     resident across the whole grid
        # b1_ref: (Chid, 1)
        # w2_ref: (Cout, Chid)    resident
        # b2_ref: (Cout, 1)
        # o_ref:  (nb, Cout, T)
        for b in range(nb):                       # static unroll over fused images
            x = x_ref[b]                          # (Cin, T), input dtype
            y = None
            for i in range(n_chunks):             # static unroll over hidden chunks
                c0 = i * chid_chunk
                sz = min(chid_chunk, chid - c0)
                # First 1x1 conv chunk + ReLU.  MXU consumes operands in their
                # native dtype (bf16 stays bf16) and accumulates in f32.
                h = jnp.dot(w1_ref[pl.ds(c0, sz), :], x,
                            preferred_element_type=jnp.float32)
                h = jnp.maximum(h + b1_ref[pl.ds(c0, sz), :], 0.0)   # act() == ReLU
                # Keep the second matmul's activation operand in the input dtype
                # so bf16 inputs do not pay an f32 MXU pass (no-op for f32).
                h = h.astype(x.dtype)
                yc = jnp.dot(w2_ref[:, pl.ds(c0, sz)], h,
                             preferred_element_type=jnp.float32)
                y = yc if y is None else y + yc
            y = jnp.maximum(y + b2_ref[...], 0.0)                    # act() == ReLU
            o_ref[b] = y.astype(o_ref.dtype)

    return kernel


def mlp_pallas(x_nchw, w1, b1, w2, b2, *,
               out_dtype=None,
               max_hidden_chunk=512,
               target_step_bytes=4 * 1024 * 1024,
               max_tile_hw=131072):
    """Fused 1x1-conv MLP, NCHW-native.

    x_nchw: (N, Cin, H, W)
    w1:     (Chid, Cin)   conv-layout (out, in) weight of the first 1x1 conv
    b1:     (Chid,)
    w2:     (Cout, Chid)
    b2:     (Cout,)
    """
    N, Cin, H, W = x_nchw.shape
    Chid = w1.shape[0]
    Cout = w2.shape[0]
    HW = H * W
    if out_dtype is None:
        out_dtype = x_nchw.dtype
    in_bytes = jnp.dtype(x_nchw.dtype).itemsize
    out_bytes = jnp.dtype(out_dtype).itemsize
    w_bytes = jnp.dtype(w1.dtype).itemsize

    # ---- VMEM budget: v7x has 64 MiB physical VMEM vs 128 MiB on v5e/v6e. ----
    try:
        vmem_cap = int(pltpu.get_tpu_info().vmem_capacity_bytes)
    except Exception:
        vmem_cap = 64 * 1024 * 1024                 # conservative v7x fallback
    vmem_limit = min(int(vmem_cap * 3 // 4), 100 * 1024 * 1024)
    vmem_limit = max(vmem_limit, 32 * 1024 * 1024)
    tile_budget = vmem_limit // 2                   # headroom for compiler scratch

    # ---- hidden chunking: never hold more than (chid_chunk, tile_hw) f32. ----
    chid_chunk = min(Chid, max_hidden_chunk)

    def per_col_bytes(nb_):
        # double-buffered x/out slabs + live f32 working values, per lane column
        return (2 * nb_ * (Cin * in_bytes + Cout * out_bytes)
                + (Cin + chid_chunk + Cout) * 4)

    # ---- spatial slab: as big as the VMEM budget allows (kernel is HBM-bound),
    #      128-lane aligned, never larger than the array's spatial extent so the
    #      only out-of-bounds lanes are the final slab's tail (clipped by Pallas).
    if HW <= 128:
        tile_hw = HW                                # single full-width block
    else:
        cols = tile_budget // per_col_bytes(1)
        tile_hw = max(128, (min(cols, HW, max_tile_hw) // 128) * 128)
    n_slabs = pl.cdiv(HW, tile_hw)

    # ---- fuse images per step when per-image slabs are tiny (amortize the
    #      ~0.35us/step grid overhead); keep >= 2 steps for v7x's two TCs. ----
    nb = 1
    if n_slabs == 1 and N >= 4:
        per_image_bytes = (Cin * in_bytes + Cout * out_bytes) * max(tile_hw, 1)
        nb = min(N // 2, max(1, target_step_bytes // per_image_bytes))
        while nb > 1 and (N % nb != 0
                          or per_col_bytes(nb) * tile_hw > tile_budget):
            nb -= 1

    # single image + single slab: split the spatial axis so both v7x TCs get work
    if (N // nb) * n_slabs < 2 and _round_up(HW, 128) >= 256:
        tile_hw = _round_up(_round_up(HW, 128) // 2, 128)
        n_slabs = pl.cdiv(HW, tile_hw)

    grid = (N // nb, n_slabs)

    # NCHW-native: free reshapes only — no transposes, no padding, no output slice.
    x_flat = x_nchw.reshape(N, Cin, HW)
    b1_2d = b1.reshape(Chid, 1)
    b2_2d = b2.reshape(Cout, 1)

    cost = pl.CostEstimate(
        flops=2 * N * HW * Chid * (Cin + Cout),
        transcendentals=0,
        bytes_accessed=(N * HW * (Cin * in_bytes + Cout * out_bytes)
                        + (Chid * (Cin + Cout + 1) + Cout) * w_bytes),
    )

    kernel = _make_mlp_kernel(nb, Chid, chid_chunk)

    out_flat = pl.pallas_call(
        kernel,
        out_shape=jax.ShapeDtypeStruct((N, Cout, HW), out_dtype),
        grid_spec=pltpu.PrefetchScalarGridSpec(
            num_scalar_prefetch=0,
            grid=grid,
            in_specs=[
                # nb images x one spatial slab; the final slab may overrun HW,
                # Pallas clips the edge-block DMAs so nothing out of range is
                # read back into HBM or written there.
                pl.BlockSpec((nb, Cin, tile_hw), lambda n, s: (n, 0, s)),
                # weights / biases: full arrays, same block every grid step
                pl.BlockSpec((Chid, Cin), lambda n, s: (0, 0)),
                pl.BlockSpec((Chid, 1), lambda n, s: (0, 0)),
                pl.BlockSpec((Cout, Chid), lambda n, s: (0, 0)),
                pl.BlockSpec((Cout, 1), lambda n, s: (0, 0)),
            ],
            out_specs=pl.BlockSpec((nb, Cout, tile_hw), lambda n, s: (n, 0, s)),
        ),
        compiler_params=pltpu.CompilerParams(
            dimension_semantics=("parallel", "parallel"),
            vmem_limit_bytes=vmem_limit,
        ),
        cost_estimate=cost,
    )(x_flat, w1, b1_2d, w2, b2_2d)

    return out_flat.reshape(N, Cout, H, W)


def mlp_reference(x_nchw, w1, b1, w2, b2):
    """Pure-JAX reference of the PyTorch forward (1x1 convs as channel matmuls)."""
    N, Cin, H, W = x_nchw.shape
    Cout = w2.shape[0]
    xf = x_nchw.reshape(N, Cin, H * W).astype(jnp.float32)
    h = jnp.maximum(
        jnp.einsum('oc,ncs->nos', w1.astype(jnp.float32), xf)
        + b1.astype(jnp.float32)[:, None], 0.0)
    y = jnp.maximum(
        jnp.einsum('oc,ncs->nos', w2.astype(jnp.float32), h)
        + b2.astype(jnp.float32)[:, None], 0.0)
    return y.reshape(N, Cout, H, W).astype(x_nchw.dtype)


if __name__ == "__main__":
    key = jax.random.PRNGKey(0)

    # Primary shapes consistent with the module: batch=2, in_channels=4,
    # hidden_channels=32, out_channels=4, spatial=16x16.
    N, Cin, Chid, Cout, Hs, Ws = 2, 4, 32, 4, 16, 16
    k_x, k_w1, k_b1, k_w2, k_b2, k_rest = jax.random.split(key, 6)

    x = jax.random.normal(k_x, (N, Cin, Hs, Ws), dtype=jnp.float32)
    # PyTorch Conv2d(k=1) weight is (out, in, 1, 1); stored here as (out, in).
    w1 = jax.random.normal(k_w1, (Chid, Cin), dtype=jnp.float32) * 0.1
    b1 = jax.random.normal(k_b1, (Chid,), dtype=jnp.float32) * 0.1
    w2 = jax.random.normal(k_w2, (Cout, Chid), dtype=jnp.float32) * 0.1
    b2 = jax.random.normal(k_b2, (Cout,), dtype=jnp.float32) * 0.1

    out = jax.block_until_ready(mlp_pallas(x, w1, b1, w2, b2))
    ref = jax.block_until_ready(mlp_reference(x, w1, b1, w2, b2))
    assert out.shape == (N, Cout, Hs, Ws), out.shape
    assert jnp.allclose(out, ref, atol=1e-5, rtol=1e-5), "mismatch vs reference"

    # Secondary check: ragged H*W (130, not a multiple of 128) exercising the
    # no-pad / clipped-edge-block path plus hidden-dim chunking.
    N2, C2, Ch2, Co2, H2, W2 = 4, 4, 32, 6, 10, 13
    ks = jax.random.split(k_rest, 6)
    x2 = jax.random.normal(ks[0], (N2, C2, H2, W2), dtype=jnp.float32)
    w1b = jax.random.normal(ks[1], (Ch2, C2), dtype=jnp.float32) * 0.1
    b1b = jax.random.normal(ks[2], (Ch2,), dtype=jnp.float32) * 0.1
    w2b = jax.random.normal(ks[3], (Co2, Ch2), dtype=jnp.float32) * 0.1
    b2b = jax.random.normal(ks[4], (Co2,), dtype=jnp.float32) * 0.1
    out2 = jax.block_until_ready(
        mlp_pallas(x2, w1b, b1b, w2b, b2b, max_hidden_chunk=8))
    ref2 = jax.block_until_ready(mlp_reference(x2, w1b, b1b, w2b, b2b))
    assert out2.shape == (N2, Co2, H2, W2), out2.shape
    assert jnp.allclose(out2, ref2, atol=1e-5, rtol=1e-5), "mismatch (ragged HW)"

    # Tertiary check: tiny H*W (<128) with multiple images fused per grid step.
    N3, H3, W3 = 4, 7, 9
    x3 = jax.random.normal(ks[5], (N3, C2, H3, W3), dtype=jnp.float32)
    out3 = jax.block_until_ready(
        mlp_pallas(x3, w1b, b1b, w2b, b2b, max_hidden_chunk=8))
    ref3 = jax.block_until_ready(mlp_reference(x3, w1b, b1b, w2b, b2b))
    assert out3.shape == (N3, Co2, H3, W3), out3.shape
    assert jnp.allclose(out3, ref3, atol=1e-5, rtol=1e-5), "mismatch (fused batch)"

    print("KERNEL_OK")
</pallas_src>

<mosaic_0001>
module attributes {stable_mosaic.version = 11 : i64} {
  func.func @kernel(%arg0: i32, %arg1: i32, %arg2: memref<1x4x256xf32, #tpu.memory_space<vmem>>, %arg3: memref<32x4xf32, #tpu.memory_space<vmem>>, %arg4: memref<32x1xf32, #tpu.memory_space<vmem>>, %arg5: memref<4x32xf32, #tpu.memory_space<vmem>>, %arg6: memref<4x1xf32, #tpu.memory_space<vmem>>, %arg7: memref<1x4x256xf32, #tpu.memory_space<vmem>>) attributes {dimension_semantics = [#tpu.dimension_semantics<parallel>, #tpu.dimension_semantics<parallel>], iteration_bounds = array<i64: 2, 1>, scalar_prefetch = 0 : i64, scratch_operands = 0 : i64, tpu.core_type = #tpu.core_type<tc>, window_params = [{transform_indices = @transform_0, window_bounds = array<i64: 1, 4, 256>}, {pipeline_mode = #tpu.pipeline_mode<synchronous>, transform_indices = @transform_1, window_bounds = array<i64: 32, 4>}, {pipeline_mode = #tpu.pipeline_mode<synchronous>, transform_indices = @transform_2, window_bounds = array<i64: 32, 1>}, {pipeline_mode = #tpu.pipeline_mode<synchronous>, transform_indices = @transform_3, window_bounds = array<i64: 4, 32>}, {pipeline_mode = #tpu.pipeline_mode<synchronous>, transform_indices = @transform_4, window_bounds = array<i64: 4, 1>}, {transform_indices = @transform_5, window_bounds = array<i64: 1, 4, 256>}]} {
    %c0 = arith.constant 0 : index
    %c0_0 = arith.constant 0 : index
    %c0_1 = arith.constant 0 : index
    %0 = vector.load %arg2[%c0, %c0_0, %c0_1] : memref<1x4x256xf32, #tpu.memory_space<vmem>>, vector<1x4x256xf32>
    %1 = vector.shape_cast %0 : vector<1x4x256xf32> to vector<4x256xf32>
    %c0_2 = arith.constant 0 : index
    %c0_3 = arith.constant 0 : index
    %2 = vector.load %arg3[%c0_2, %c0_3] : memref<32x4xf32, #tpu.memory_space<vmem>>, vector<32x4xf32>
    %cst = arith.constant dense<0.000000e+00> : vector<32x256xf32>
    %3 = tpu.matmul %2, %1, %cst {dimension_numbers = #tpu.dot_dimension_numbers<[1], [0], [0], [1], [0, 0, 1, 1], [], []>} : vector<32x4xf32>, vector<4x256xf32>, vector<32x256xf32> -> vector<32x256xf32>
    %c0_4 = arith.constant 0 : index
    %c0_5 = arith.constant 0 : index
    %4 = vector.load %arg4[%c0_4, %c0_5] : memref<32x1xf32, #tpu.memory_space<vmem>>, vector<32x1xf32>
    %5 = vector.broadcast %4 : vector<32x1xf32> to vector<32x256xf32>
    %6 = arith.addf %3, %5 : vector<32x256xf32>
    %cst_6 = arith.constant 0.000000e+00 : f32
    %7 = vector.broadcast %cst_6 : f32 to vector<32x256xf32>
    %8 = arith.maximumf %6, %7 : vector<32x256xf32>
    %c0_7 = arith.constant 0 : index
    %c0_8 = arith.constant 0 : index
    %9 = vector.load %arg5[%c0_7, %c0_8] : memref<4x32xf32, #tpu.memory_space<vmem>>, vector<4x32xf32>
    %cst_9 = arith.constant dense<0.000000e+00> : vector<4x256xf32>
    %10 = tpu.matmul %9, %8, %cst_9 {dimension_numbers = #tpu.dot_dimension_numbers<[1], [0], [0], [1], [0, 0, 1, 1], [], []>} : vector<4x32xf32>, vector<32x256xf32>, vector<4x256xf32> -> vector<4x256xf32>
    %c0_10 = arith.constant 0 : index
    %c0_11 = arith.constant 0 : index
    %11 = vector.load %arg6[%c0_10, %c0_11] : memref<4x1xf32, #tpu.memory_space<vmem>>, vector<4x1xf32>
    %12 = vector.broadcast %11 : vector<4x1xf32> to vector<4x256xf32>
    %13 = arith.addf %10, %12 : vector<4x256xf32>
    %cst_12 = arith.constant 0.000000e+00 : f32
    %14 = vector.broadcast %cst_12 : f32 to vector<4x256xf32>
    %15 = arith.maximumf %13, %14 : vector<4x256xf32>
    %c0_13 = arith.constant 0 : index
    %c0_14 = arith.constant 0 : index
    %c0_15 = arith.constant 0 : index
    %16 = vector.load %arg7[%c0_13, %c0_14, %c0_15] : memref<1x4x256xf32, #tpu.memory_space<vmem>>, vector<1x4x256xf32>
    %17 = vector.shape_cast %16 : vector<1x4x256xf32> to vector<4x256xf32>
    %18 = vector.shape_cast %15 : vector<4x256xf32> to vector<1x4x256xf32>
    tpu.vector_store %arg7[%c0_13, %c0_14, %c0_15], %18 {strides = array<i32>} : memref<1x4x256xf32, #tpu.memory_space<vmem>>, vector<1x4x256xf32>,
    return
  }
  func.func @transform_0(%arg0: i32, %arg1: i32) -> (i32, i32, i32) {
    %c0_i32 = arith.constant 0 : i32
    %c0_i32_0 = arith.constant 0 : i32
    return %arg0, %c0_i32, %arg1 : i32, i32, i32
  }
  func.func @transform_1(%arg0: i32, %arg1: i32) -> (i32, i32) {
    %c0_i32 = arith.constant 0 : i32
    %c0_i32_0 = arith.constant 0 : i32
    %c0_i32_1 = arith.constant 0 : i32
    return %c0_i32, %c0_i32_0 : i32, i32
  }
  func.func @transform_2(%arg0: i32, %arg1: i32) -> (i32, i32) {
    %c0_i32 = arith.constant 0 : i32
    %c0_i32_0 = arith.constant 0 : i32
    %c0_i32_1 = arith.constant 0 : i32
    return %c0_i32, %c0_i32_0 : i32, i32
  }
  func.func @transform_3(%arg0: i32, %arg1: i32) -> (i32, i32) {
    %c0_i32 = arith.constant 0 : i32
    %c0_i32_0 = arith.constant 0 : i32
    %c0_i32_1 = arith.constant 0 : i32
    return %c0_i32, %c0_i32_0 : i32, i32
  }
  func.func @transform_4(%arg0: i32, %arg1: i32) -> (i32, i32) {
    %c0_i32 = arith.constant 0 : i32
    %c0_i32_0 = arith.constant 0 : i32
    %c0_i32_1 = arith.constant 0 : i32
    return %c0_i32, %c0_i32_0 : i32, i32
  }
  func.func @transform_5(%arg0: i32, %arg1: i32) -> (i32, i32, i32) {
    %c0_i32 = arith.constant 0 : i32
    %c0_i32_0 = arith.constant 0 : i32
    return %arg0, %c0_i32, %arg1 : i32, i32, i32
  }
}

</mosaic_0001>

<llo_original>
// kernel: tpu_custom_call.1
$region0: #{tpu_custom_call.1}
  #allocation0 [shape = 'u32[]', space=smem, size = 0x4, offset = 0x4, fixed_abs, tag = 'smem constant byte address 0x4 - core index']
  #allocation1 [shape = 'u32[72,128]{1,0:T(1,128)}', space=vmem, size = 0x9000, scoped, tag = 'internal scratch']
  %s0 = inlined_call_operand.vmem [shape: f32[2,4,256], index: 0, kind: input, shape index: {}]
  %s1 = inlined_call_operand.vmem [shape: f32[32,4], index: 1, kind: input, shape index: {}]
  %s2 = inlined_call_operand.vmem [shape: f32[32,1], index: 2, kind: input, shape index: {}]
  %s3 = inlined_call_operand.vmem [shape: f32[4,32], index: 3, kind: input, shape index: {}]
  %s4 = inlined_call_operand.vmem [shape: f32[4,1], index: 4, kind: input, shape index: {}]
  %s5 = inlined_call_operand.hbm [shape: f32[2,4,256], index: 5, kind: output, shape index: {}]
  %s6 = sld [smem:[#allocation0]]
  $region53: #{tpu_custom_call.1} parent=0
    _
  %s8 = ssub.s32 1, %s6
  %s9 = scalar_select 0, %s8, %s6
  $region1: #{tpu_custom_call.1} parent=0
    #allocation2 [shape = 'u8[8192]{0}', space=vmem, size = 0x2000, scoped, tag = 'output window, operand 0']
    #allocation3 [shape = 's32[2]{0}', space=sflag, size = 0x8, scoped, tag = 'scoped memory for tpu_custom_call.1']
    %10 = vsyncpa [#allocation3], 0
    %s11 = scalar_lea.sflag [#allocation3], 1
    %12 = vsyncpa %s11, 0
    loop: start=0, step=1, limit=4
    $region2: #{tpu_custom_call.1} parent=1 // loop_pre_header
      _
    $region3: #{tpu_custom_call.1} parent=1 // loop_header
      %s14 = sphi 0, %s18
      %p15 = scmp.ge.s32.totalorder %s14, 4
      %s21 = sphi 0, %s33
      %s22 = sphi 0, %s29
      %s23 = sphi 0, %s21
      %s24 = sphi 0, %s22
      %s25 = sphi 0, %s23
      %s26 = sphi 0, %s24
      %s38 = sphi 0, %s40
      %s41 = sphi 0, %s38
      %s42 = sphi 0, %s41
      %s58 = sphi 0, %s42
      %s62 = sphi 0, %s62
      %s64 = sphi 0, %s62
      %s65 = sphi 0, %s64
      %s79 = sphi 0, %s65
      %s83 = sphi 0, %s83
      %s85 = sphi 0, %s83
      %s86 = sphi 0, %s85
      %s100 = sphi 0, %s86
      %s104 = sphi 0, %s104
      %s106 = sphi 0, %s104
      %s107 = sphi 0, %s106
      %s121 = sphi 0, %s107
      %s125 = sphi 0, %s125
      %s127 = sphi 0, %s125
      %s128 = sphi 0, %s127
      %s142 = sphi 0, %s128
      %s150 = sphi 0, %s152
      %s153 = sphi 0, %s150
      %s154 = sphi 0, %s153
      %s170 = sphi 0, %s154
    $region4: #{tpu_custom_call.1} parent=1 // loop_header_branch
      %17 = sbr.rel (%p15) target = $region8
    $region5: #{tpu_custom_call.1} parent=1 // loop_body
      %s19 = ssub.s32 %s14, 1
      %s20 = ssub.s32 %s14, 2
      %s27 = sadd.s32 1, %s22
      %p28 = scmp.ge.s32.totalorder %s27, 1
      %s29 = scalar_select %p28, 0, %s27
      %s30 = sadd.s32 1, %s21
      %s31 = scalar_select %p28, %s30, %s21
      %p32 = scmp.ge.s32.totalorder %s31, 2
      %s33 = scalar_select %p32, 0, %s31
      %s34 = ssub.s32 %s21, %s33
      %s35 = ssub.s32 %s22, %s29
      %s36 = sor.u32 %s34, %s35
      %p37 = scmp.eq.s32.totalorder %s36, 0
      %s39 = sadd.s32 %s38, 1
      %s40 = scalar_select %p37, %s38, %s39
      %p43 = pneg %p37
      %p44 = scmp.eq.s32.totalorder %s14, 1
      %p45 = por %p43, %p44
      %p46 = scmp.ne.s32.totalorder %s38, %s41
      %p47 = scmp.eq.s32.totalorder %s14, 0
      %p48 = por %p46, %p47
      %p49 = scmp.ne.s32.totalorder %s38, %s41
      %p50 = scmp.eq.s32.totalorder %s19, 1
      %p51 = por %p49, %p50
      %p52 = scmp.ne.s32.totalorder %s41, %s42
      %p53 = scmp.eq.s32.totalorder %s19, 0
      %p54 = por %p52, %p53
      %p55 = scmp.ne.s32.totalorder %s41, %s42
      %p56 = scmp.eq.s32.totalorder %s20, 1
      %p57 = por %p55, %p56
      %p59 = scmp.ne.s32.totalorder %s42, %s58
      %p60 = scmp.eq.s32.totalorder %s20, 0
      %p61 = por %p59, %p60
      %s63 = sadd.s32 %s62, 1
      %p66 = scmp.eq.s32.totalorder %s14, 1
      %p67 = scmp.ne.s32.totalorder %s62, %s64
      %p68 = scmp.eq.s32.totalorder %s14, 0
      %p69 = por %p67, %p68
      %p70 = scmp.ne.s32.totalorder %s62, %s64
      %p71 = scmp.eq.s32.totalorder %s19, 1
      %p72 = por %p70, %p71
      %p73 = scmp.ne.s32.totalorder %s64, %s65
      %p74 = scmp.eq.s32.totalorder %s19, 0
      %p75 = por %p73, %p74
      %p76 = scmp.ne.s32.totalorder %s64, %s65
      %p77 = scmp.eq.s32.totalorder %s20, 1
      %p78 = por %p76, %p77
      %p80 = scmp.ne.s32.totalorder %s65, %s79
      %p81 = scmp.eq.s32.totalorder %s20, 0
      %p82 = por %p80, %p81
      %s84 = sadd.s32 %s83, 1
      %p87 = scmp.eq.s32.totalorder %s14, 1
      %p88 = scmp.ne.s32.totalorder %s83, %s85
      %p89 = scmp.eq.s32.totalorder %s14, 0
      %p90 = por %p88, %p89
      %p91 = scmp.ne.s32.totalorder %s83, %s85
      %p92 = scmp.eq.s32.totalorder %s19, 1
      %p93 = por %p91, %p92
      %p94 = scmp.ne.s32.totalorder %s85, %s86
      %p95 = scmp.eq.s32.totalorder %s19, 0
      %p96 = por %p94, %p95
      %p97 = scmp.ne.s32.totalorder %s85, %s86
      %p98 = scmp.eq.s32.totalorder %s20, 1
      %p99 = por %p97, %p98
      %p101 = scmp.ne.s32.totalorder %s86, %s100
      %p102 = scmp.eq.s32.totalorder %s20, 0
      %p103 = por %p101, %p102
      %s105 = sadd.s32 %s104, 1
      %p108 = scmp.eq.s32.totalorder %s14, 1
      %p109 = scmp.ne.s32.totalorder %s104, %s106
      %p110 = scmp.eq.s32.totalorder %s14, 0
      %p111 = por %p109, %p110
      %p112 = scmp.ne.s32.totalorder %s104, %s106
      %p113 = scmp.eq.s32.totalorder %s19, 1
      %p114 = por %p112, %p113
      %p115 = scmp.ne.s32.totalorder %s106, %s107
      %p116 = scmp.eq.s32.totalorder %s19, 0
      %p117 = por %p115, %p116
      %p118 = scmp.ne.s32.totalorder %s106, %s107
      %p119 = scmp.eq.s32.totalorder %s20, 1
      %p120 = por %p118, %p119
      %p122 = scmp.ne.s32.totalorder %s107, %s121
      %p123 = scmp.eq.s32.totalorder %s20, 0
      %p124 = por %p122, %p123
      %s126 = sadd.s32 %s125, 1
      %p129 = scmp.eq.s32.totalorder %s14, 1
      %p130 = scmp.ne.s32.totalorder %s125, %s127
      %p131 = scmp.eq.s32.totalorder %s14, 0
      %p132 = por %p130, %p131
      %p133 = scmp.ne.s32.totalorder %s125, %s127
      %p134 = scmp.eq.s32.totalorder %s19, 1
      %p135 = por %p133, %p134
      %p136 = scmp.ne.s32.totalorder %s127, %s128
      %p137 = scmp.eq.s32.totalorder %s19, 0
      %p138 = por %p136, %p137
      %p139 = scmp.ne.s32.totalorder %s127, %s128
      %p140 = scmp.eq.s32.totalorder %s20, 1
      %p141 = por %p139, %p140
      %p143 = scmp.ne.s32.totalorder %s128, %s142
      %p144 = scmp.eq.s32.totalorder %s20, 0
      %p145 = por %p143, %p144
      %s146 = ssub.s32 %s21, %s33
      %s147 = ssub.s32 %s22, %s29
      %s148 = sor.u32 %s146, %s147
      %p149 = scmp.eq.s32.totalorder %s148, 0
      %s151 = sadd.s32 %s150, 1
      %s152 = scalar_select %p149, %s150, %s151
      %p155 = pneg %p149
      %p156 = scmp.eq.s32.totalorder %s14, 1
      %p157 = por %p155, %p156
      %p158 = scmp.ne.s32.totalorder %s150, %s153
      %p159 = scmp.eq.s32.totalorder %s14, 0
      %p160 = por %p158, %p159
      %p161 = scmp.ne.s32.totalorder %s150, %s153
      %p162 = scmp.eq.s32.totalorder %s19, 1
      %p163 = por %p161, %p162
      %p164 = scmp.ne.s32.totalorder %s153, %s154
      %p165 = scmp.eq.s32.totalorder %s19, 0
      %p166 = por %p164, %p165
      %p167 = scmp.ne.s32.totalorder %s153, %s154
      %p168 = scmp.eq.s32.totalorder %s20, 1
      %p169 = por %p167, %p168
      %p171 = scmp.ne.s32.totalorder %s154, %s170
      %p172 = scmp.eq.s32.totalorder %s20, 0
      %p173 = por %p171, %p172
      %p174 = scmp.le.s32.totalorder 1, %s14
      %p175 = scmp.lt.s32.totalorder %s14, 3
      %p176 = pnand %p174, %p175
      %p177 = pneg %p176
      // Predicated region
      $region9: #{tpu_custom_call.1} parent=5 // pred_check
        _
      $region10: #{tpu_custom_call.1} parent=5 // pred_check_branch
        %179 = sbr.rel (%p176) target = $region12
      $region11: #{tpu_custom_call.1} parent=5 // pred_region
        %s180 = ssub.s32 %s14, 1
        // Predicated region
        $region13: #{tpu_custom_call.1} parent=11 // pred_check
          %p181 = pneg %p75
        $region14: #{tpu_custom_call.1} parent=11 // pred_check_branch
          %183 = sbr.rel (%p181) target = $region16
        $region15: #{tpu_custom_call.1} parent=11 // pred_region
          _
        $region16: #{tpu_custom_call.1} parent=11 // pred_fallthru
          _
        // Predicated region
        $region17: #{tpu_custom_call.1} parent=11 // pred_check
          %p184 = pneg %p96
        $region18: #{tpu_custom_call.1} parent=11 // pred_check_branch
          %186 = sbr.rel (%p184) target = $region20
        $region19: #{tpu_custom_call.1} parent=11 // pred_region
          _
        $region20: #{tpu_custom_call.1} parent=11 // pred_fallthru
          _
        // Predicated region
        $region21: #{tpu_custom_call.1} parent=11 // pred_check
          %p187 = pneg %p117
        $region22: #{tpu_custom_call.1} parent=11 // pred_check_branch
          %189 = sbr.rel (%p187) target = $region24
        $region23: #{tpu_custom_call.1} parent=11 // pred_region
          _
        $region24: #{tpu_custom_call.1} parent=11 // pred_fallthru
          _
        // Predicated region
        $region25: #{tpu_custom_call.1} parent=11 // pred_check
          %p190 = pneg %p138
        $region26: #{tpu_custom_call.1} parent=11 // pred_check_branch
          %192 = sbr.rel (%p190) target = $region28
        $region27: #{tpu_custom_call.1} parent=11 // pred_region
          _
        $region28: #{tpu_custom_call.1} parent=11 // pred_fallthru
          _
      $region12: #{tpu_custom_call.1} parent=5 // pred_fallthru
        _
      %p193 = scmp.lt.s32.totalorder %s14, 2
      // Predicated region
      $region29: #{tpu_custom_call.1} parent=5 // pred_check
        %p194 = pneg %p193
      $region30: #{tpu_custom_call.1} parent=5 // pred_check_branch
        %196 = sbr.rel (%p194) target = $region32
      $region31: #{tpu_custom_call.1} parent=5 // pred_region
        // Predicated region
        $region33: #{tpu_custom_call.1} parent=31 // pred_check
          %p197 = pneg %p48
        $region34: #{tpu_custom_call.1} parent=31 // pred_check_branch
          %199 = sbr.rel (%p197) target = $region36
        $region35: #{tpu_custom_call.1} parent=31 // pred_region
          %s200 = smul.u32 2, %s22
          %p201 = scmp.lt.s32.totalorder %s21, 1
          %s202 = scalar_select %p201, %s21, 1
          %p203 = scmp.lt.s32.totalorder %s200, 1
          %s204 = scalar_select %p203, %s200, 1
          %s205 = smul.addr %s202, 2
          %s206 = sadd.s32 %s204, %s205
          %s207 = smul.addr %s206, 4
          %s208 = scalar_lea.vmem %s0, %s207
          %s209 = smul.u32 2, %s22
        $region36: #{tpu_custom_call.1} parent=31 // pred_fallthru
          _
      $region32: #{tpu_custom_call.1} parent=5 // pred_fallthru
        _
      %p210 = scmp.le.s32.totalorder 1, %s14
      %p211 = scmp.lt.s32.totalorder %s14, 3
      %p212 = pnand %p210, %p211
      %p213 = pneg %p212
      // Predicated region
      $region37: #{tpu_custom_call.1} parent=5 // pred_check
        _
      $region38: #{tpu_custom_call.1} parent=5 // pred_check_branch
        %215 = sbr.rel (%p212) target = $region40
      $region39: #{tpu_custom_call.1} parent=5 // pred_region
        %s216 = ssub.s32 %s14, 1
        %s217 = smul.u32 2, %s24
        %p218 = scmp.lt.s32.totalorder %s23, 1
        %s219 = scalar_select %p218, %s23, 1
        %p220 = scmp.lt.s32.totalorder %s217, 1
        %s221 = scalar_select %p220, %s217, 1
        %s222 = smul.addr %s219, 2
        %s223 = sadd.s32 %s221, %s222
        %s224 = smul.addr %s223, 4
        %s225 = scalar_lea.vmem %s0, %s224
        %p226 = pneg %p54
        %p227 = pneg %p51
        %p228 = pneg %p75
        %p229 = pneg %p72
        %p230 = pneg %p96
        %p231 = pneg %p93
        %p232 = pneg %p117
        %p233 = pneg %p114
        %p234 = pneg %p138
        %p235 = pneg %p135
        %p236 = pneg %p166
        %p237 = pneg %p163
        %s238 = sand.u32 %s153, 1
        %s239 = scalar_lea.sflag [#allocation3], %s238
        %s240 = sand.u32 %s153, 1
        %s241 = smul.addr %s240, 8
        %s242 = scalar_lea.vmem [#allocation2], %s241
        %s243 = smul.u32 2, %s24
        %p244 = scmp.lt.s32.totalorder %s23, 1
        %s245 = scalar_select %p244, %s23, 1
        %p246 = scmp.lt.s32.totalorder %s243, 1
        %s247 = scalar_select %p246, %s243, 1
        %s248 = smul.addr %s245, 2
        %s249 = sadd.s32 %s247, %s248
        %s250 = smul.addr %s249, 4
        %s251 = scalar_lea.vmem %s0, %s250
        %s252 = smul.u32 2, %s24
        %s253 = smul.u32 2, %s24
        %v254 = vld [vmem:[%s251] sm:$0xff]
        %v255 = vld [vmem:[%s1] sm:$0xff]
        %v256 = vld [vmem:[%s1 + $0x8] sm:$0xff]
        %v257 = vld [vmem:[%s1 + $0x10] sm:$0xff]
        %v258 = vld [vmem:[%s1 + $0x18] sm:$0xff]
        %v259 = vld [vmem:[%s2] sm:$0xff]
        %v260 = vld [vmem:[%s2 + $0x8] sm:$0xff]
        %v261 = vld [vmem:[%s2 + $0x10] sm:$0xff]
        %v262 = vld [vmem:[%s2 + $0x18] sm:$0xff]
        %264 = vset.pattern.permute.xlu0 0
        %265 = vperm.xlu0 %264, %v259
        %v266 = vpop.permute.xlu0 %265
        %269 = vset.pattern.permute.xlu0 0
        %270 = vperm.xlu0 %269, %v260
        %v271 = vpop.permute.xlu0 %270
        %274 = vset.pattern.permute.xlu0 0
        %275 = vperm.xlu0 %274, %v261
        %v276 = vpop.permute.xlu0 %275
        %279 = vset.pattern.permute.xlu0 0
        %280 = vperm.xlu0 %279, %v262
        %v281 = vpop.permute.xlu0 %280
        %284 = vst [vmem:[#allocation1] ss:$2 sm:$0xff] %v254
        %v285 = vld.sshfl [vmem:[#allocation1] sm:$0xff pattern:$0x75316420]
        %v286 = vld.sshfl [vmem:[#allocation1 + $0x8] sm:$0xff pattern:$0x75316420]
        %vm287 = vcmask 31744
        %v289 = vsel %vm287, %v255, 0
        %v292 = vsel %vm287, %v256, 0
        %v295 = vsel %vm287, %v257, 0
        %v298 = vsel %vm287, %v258, 0
        %vm300 = vcmask 1043456
        %v301 = vsel %vm300, %v285, 0
        %v303 = vsel %vm300, %v286, 0
        %305 = vmatpush.msra.mxu0 0.0
        %306 = vmatpush.msra.mxu0 0.0
        %307 = vmatpush.msra.mxu0 0.0
        %308 = vmatpush.msra.mxu0 0.0
        %309 = vmatpush.msra.mxu0 0.0
        %310 = vmatpush.msra.mxu0 0.0
        %311 = vmatpush.msra.mxu0 0.0
        %312 = vmatpush.msra.mxu0 0.0
        %313 = vmatpush.msra.mxu0 0.0
        %314 = vmatpush.msra.mxu0 0.0
        %315 = vmatpush.msra.mxu0 0.0
        %316 = vmatpush.msra.mxu0 0.0
        %317 = vmatpush.msra.mxu0 0.0
        %318 = vmatpush.msra.mxu0 0.0
        %319 = vmatpush.msra.mxu0 0.0
        %320 = vmatpush.msra.mxu0 %v301
        %321 = vmatmul.f32.gmra.mxu0 %v289
        %v322 = vpop.f32.mrf.mxu0
        %v323 = vadd.f32 %v266, %v322
        %324 = vmatmul.f32.gmra.mxu0 %v292
        %v325 = vpop.f32.mrf.mxu0
        %v326 = vadd.f32 %v271, %v325
        %327 = vmatmul.f32.gmra.mxu0 %v295
        %v328 = vpop.f32.mrf.mxu0
        %v329 = vadd.f32 %v276, %v328
        %330 = vmatmul.f32.gmra.mxu0 %v298
        %v331 = vpop.f32.mrf.mxu0
        %v332 = vadd.f32 %v281, %v331
        %333 = vdwg.mxu0
        %334 = vmatpush.msra.mxu0 0.0
        %335 = vmatpush.msra.mxu0 0.0
        %336 = vmatpush.msra.mxu0 0.0
        %337 = vmatpush.msra.mxu0 0.0
        %338 = vmatpush.msra.mxu0 0.0
        %339 = vmatpush.msra.mxu0 0.0
        %340 = vmatpush.msra.mxu0 0.0
        %341 = vmatpush.msra.mxu0 0.0
        %342 = vmatpush.msra.mxu0 0.0
        %343 = vmatpush.msra.mxu0 0.0
        %344 = vmatpush.msra.mxu0 0.0
        %345 = vmatpush.msra.mxu0 0.0
        %346 = vmatpush.msra.mxu0 0.0
        %347 = vmatpush.msra.mxu0 0.0
        %348 = vmatpush.msra.mxu0 0.0
        %349 = vmatpush.msra.mxu0 %v303
        %350 = vmatmul.f32.gmra.mxu0 %v289
        %v351 = vpop.f32.mrf.mxu0
        %v352 = vadd.f32 %v266, %v351
        %353 = vmatmul.f32.gmra.mxu0 %v292
        %v354 = vpop.f32.mrf.mxu0
        %v355 = vadd.f32 %v271, %v354
        %356 = vmatmul.f32.gmra.mxu0 %v295
        %v357 = vpop.f32.mrf.mxu0
        %v358 = vadd.f32 %v276, %v357
        %359 = vmatmul.f32.gmra.mxu0 %v298
        %v360 = vpop.f32.mrf.mxu0
        %v361 = vadd.f32 %v281, %v360
        %362 = vdwg.mxu0
        %v363 = vmax.f32 %v323, 0.0
        %v364 = vmax.f32 %v352, 0.0
        %v365 = vmax.f32 %v326, 0.0
        %v366 = vmax.f32 %v355, 0.0
        %v367 = vmax.f32 %v329, 0.0
        %v368 = vmax.f32 %v358, 0.0
        %v369 = vmax.f32 %v332, 0.0
        %v370 = vmax.f32 %v361, 0.0
        %v371 = vld [vmem:[%s3] sm:$0xf]
        %v372 = vld [vmem:[%s4] sm:$0xf]
        %374 = vset.pattern.permute.xlu0 0
        %375 = vperm.xlu0 %374, %v372
        %v376 = vpop.permute.xlu0 %375
        %vm378 = vcmask 261120
        %v380 = vsel %vm378, %v371, 0
        %382 = vmatpush.msra.mxu0 0.0
        %383 = vmatpush.msra.mxu0 0.0
        %384 = vmatpush.msra.mxu0 0.0
        %385 = vmatpush.msra.mxu0 0.0
        %386 = vmatpush.msra.mxu0 0.0
        %387 = vmatpush.msra.mxu0 0.0
        %388 = vmatpush.msra.mxu0 0.0
        %389 = vmatpush.msra.mxu0 0.0
        %390 = vmatpush.msra.mxu0 0.0
        %391 = vmatpush.msra.mxu0 0.0
        %392 = vmatpush.msra.mxu0 0.0
        %393 = vmatpush.msra.mxu0 0.0
        %394 = vmatpush.msra.mxu0 %v369
        %395 = vmatpush.msra.mxu0 %v367
        %396 = vmatpush.msra.mxu0 %v365
        %397 = vmatpush.msra.mxu0 %v363
        %398 = vmatmul.f32.gmra.mxu0 %v380
        %v399 = vpop.f32.mrf.mxu0
        %v400 = vadd.f32 %v376, %v399
        %401 = vdwg.mxu0
        %402 = vmatpush.msra.mxu0 0.0
        %403 = vmatpush.msra.mxu0 0.0
        %404 = vmatpush.msra.mxu0 0.0
        %405 = vmatpush.msra.mxu0 0.0
        %406 = vmatpush.msra.mxu0 0.0
        %407 = vmatpush.msra.mxu0 0.0
        %408 = vmatpush.msra.mxu0 0.0
        %409 = vmatpush.msra.mxu0 0.0
        %410 = vmatpush.msra.mxu0 0.0
        %411 = vmatpush.msra.mxu0 0.0
        %412 = vmatpush.msra.mxu0 0.0
        %413 = vmatpush.msra.mxu0 0.0
        %414 = vmatpush.msra.mxu0 %v370
        %415 = vmatpush.msra.mxu0 %v368
        %416 = vmatpush.msra.mxu0 %v366
        %417 = vmatpush.msra.mxu0 %v364
        %418 = vmatmul.f32.gmra.mxu0 %v380
        %v419 = vpop.f32.mrf.mxu0
        %v420 = vadd.f32 %v376, %v419
        %421 = vdwg.mxu0
        %v422 = vmax.f32 %v400, 0.0
        %v423 = vmax.f32 %v420, 0.0
        %v426 = vrot.slane %v423, 4
        %v427 = vsel %vm300, %v422, %v426
        %429 = vst [vmem:[%s242] sm:$0xff] %v427
        %s430 = sand.u32 %s153, 1
        %s431 = scalar_lea.sflag [#allocation3], %s430
        %s432 = sand.u32 %s153, 1
        %s433 = smul.addr %s432, 8
        %s434 = scalar_lea.vmem [#allocation2], %s433
        // Predicated region
        $region41: #{tpu_custom_call.1} parent=39 // pred_check
          %p435 = pneg %p163
        $region42: #{tpu_custom_call.1} parent=39 // pred_check_branch
          %437 = sbr.rel (%p435) target = $region44
        $region43: #{tpu_custom_call.1} parent=39 // pred_region
          %s438 = smul.u32 2, %s24
          %440 = vsyncadd %s431, 0
          %s441 = smul.addr %s23, 2
          %s442 = sadd.s32 %s438, %s441
          %s443 = smul.addr %s442, 4
          %s444 = scalar_lea.hbm %s5, %s443
          %s446 = sshll.u32 %s434, 4
          %s447 = int_to_ptr.vmem [resolvable:$true] %s446
          %s448 = sshll.u32 %s444, 4
          %s449 = int_to_ptr.hbm [resolvable:$true] %s448
          %451 = dma.vmem_to_hbm [thread:$0]  %s447, 128, %s449, %s431
        $region44: #{tpu_custom_call.1} parent=39 // pred_fallthru
          _
      $region40: #{tpu_custom_call.1} parent=5 // pred_fallthru
        _
      %p452 = scmp.le.s32.totalorder 2, %s14
      // Predicated region
      $region45: #{tpu_custom_call.1} parent=5 // pred_check
        %p453 = pneg %p452
      $region46: #{tpu_custom_call.1} parent=5 // pred_check_branch
        %455 = sbr.rel (%p453) target = $region48
      $region47: #{tpu_custom_call.1} parent=5 // pred_region
        %s456 = ssub.s32 %s14, 2
        // Predicated region
        $region49: #{tpu_custom_call.1} parent=47 // pred_check
          %p457 = pneg %p169
        $region50: #{tpu_custom_call.1} parent=47 // pred_check_branch
          %459 = sbr.rel (%p457) target = $region52
        $region51: #{tpu_custom_call.1} parent=47 // pred_region
          %s460 = sand.u32 %s154, 1
          %s461 = scalar_lea.sflag [#allocation3], %s460
          %s462 = sand.u32 %s154, 1
          %s463 = smul.addr %s462, 8
          %s464 = scalar_lea.vmem [#allocation2], %s463
          %466 = dma.done %s461, 128
        $region52: #{tpu_custom_call.1} parent=47 // pred_fallthru
          _
      $region48: #{tpu_custom_call.1} parent=5 // pred_fallthru
        _
    $region6: #{tpu_custom_call.1} parent=1 // loop_footer
      %s18 = sadd.s32 1, %s14
    $region7: #{tpu_custom_call.1} parent=1 // loop_footer_branch
      %13 = sbr.rel target = $region3
    $region8: #{tpu_custom_call.1} parent=1 // loop_exit
      _
    %467 = vsyncpa [#allocation3], 1
    %s468 = scalar_lea.sflag [#allocation3], 1
    %469 = vsyncpa %s468, 1

</llo_original>
